<compile_context>
chip_gen: v5e
topology: v5e:2x2
jax: 0.10.0
libtpu: 0.0.40
codegen_flags: <defaults>
</compile_context>

<pallas_src>
import jax
import jax.numpy as jnp
from jax.experimental import pallas as pl
from jax.experimental.pallas import tpu as pltpu


def _add_one_kernel(x_ref, o_ref):
    # Elementwise hot path: whole VMEM tile processed on the VPU.
    o_ref[...] = x_ref[...] + 1


# Default lane-dense column width (multiple of 128, >= 1024 for wide stores).
_LANE_C = 1024
# Max rows per block: (1024, 1024) f32 tile = 4 MiB per buffer.
_MAX_TR = 1024
# Inputs up to this many elements (2 MiB of f32) go through the single-block
# fast path with no reshuffling/padding at all.
_SMALL_LIMIT = 512 * 1024


def nm_model_forward(x: jax.Array) -> jax.Array:
    """Pallas equivalent of NmModel.forward: returns x + 1 (any shape/dtype)."""
    orig_shape = x.shape
    flat = x.reshape(-1)
    n = int(flat.shape[0])

    if n == 0:
        # Degenerate empty input: nothing to compute.
        return x

    pad = 0
    # Pick the widest lane-dense column count that divides n exactly so the
    # wrapper adds zero pad/slice copies.
    c = 0
    for cand in (4096, 2048, 1024, 512, 256, 128):
        if n % cand == 0:
            c = cand
            break

    if c:
        r = n // c
        x2 = flat.reshape(r, c)
    elif n <= _SMALL_LIMIT:
        # Small/odd-sized input: one whole-array block (full-extent block
        # shapes bypass the (8,128) rule); no padding, single grid step.
        r, c = 1, n
        x2 = flat.reshape(1, n)
    else:
        # Large input whose size is not a multiple of 128: pad once to a
        # lane-dense width (rare fallback).
        c = _LANE_C
        pad = (-n) % c
        flat = jnp.pad(flat, (0, pad))
        r = (n + pad) // c
        x2 = flat.reshape(r, c)

    # Row tile: full extent when small, otherwise up to 1024 rows per block.
    tr = r if r <= _MAX_TR else _MAX_TR

    out2 = pl.pallas_call(
        _add_one_kernel,
        out_shape=jax.ShapeDtypeStruct((r, c), x2.dtype),
        grid=(pl.cdiv(r, tr),),
        in_specs=[pl.BlockSpec((tr, c), lambda i: (i, 0))],
        out_specs=pl.BlockSpec((tr, c), lambda i: (i, 0)),
        compiler_params=pltpu.CompilerParams(
            dimension_semantics=("parallel",)
        ),
    )(x2)

    out_flat = out2.reshape(-1)
    if pad:
        out_flat = out_flat[:n]
    return out_flat.reshape(orig_shape)


if __name__ == "__main__":
    key = jax.random.PRNGKey(0)
    # Small NCHW-like input consistent with a generic module: (2, 4, 16, 16).
    x = jax.random.normal(key, (2, 4, 16, 16), dtype=jnp.float32)

    out = nm_model_forward(x)
    out = jax.block_until_ready(out)

    # Correctness check against the reference semantics: output = input + 1.
    expected = x + 1
    assert out.shape == x.shape and out.dtype == x.dtype
    assert jnp.allclose(out, expected, atol=0, rtol=0), "mismatch vs reference"

    print("KERNEL_OK")
</pallas_src>

<mosaic_0001>
module attributes {stable_mosaic.version = 11 : i64} {
  func.func @_add_one_kernel(%arg0: i32, %arg1: memref<1x2048xf32, #tpu.memory_space<vmem>>, %arg2: memref<1x2048xf32, #tpu.memory_space<vmem>>) attributes {dimension_semantics = [#tpu.dimension_semantics<parallel>], iteration_bounds = array<i64: 1>, scalar_prefetch = 0 : i64, scratch_operands = 0 : i64, tpu.core_type = #tpu.core_type<tc>, window_params = [{transform_indices = @transform_0, window_bounds = array<i64: 1, 2048>}, {transform_indices = @transform_1, window_bounds = array<i64: 1, 2048>}]} {
    %c0 = arith.constant 0 : index
    %c0_0 = arith.constant 0 : index
    %0 = vector.load %arg1[%c0, %c0_0] : memref<1x2048xf32, #tpu.memory_space<vmem>>, vector<1x2048xf32>
    %cst = arith.constant 1.000000e+00 : f32
    %1 = vector.broadcast %cst : f32 to vector<1x2048xf32>
    %2 = arith.addf %0, %1 : vector<1x2048xf32>
    %c0_1 = arith.constant 0 : index
    %c0_2 = arith.constant 0 : index
    %3 = vector.load %arg2[%c0_1, %c0_2] : memref<1x2048xf32, #tpu.memory_space<vmem>>, vector<1x2048xf32>
    tpu.vector_store %arg2[%c0_1, %c0_2], %2 {strides = array<i32>} : memref<1x2048xf32, #tpu.memory_space<vmem>>, vector<1x2048xf32>,
    return
  }
  func.func @transform_0(%arg0: i32) -> (i32, i32) {
    %c0_i32 = arith.constant 0 : i32
    %c0_i32_0 = arith.constant 0 : i32
    return %arg0, %c0_i32 : i32, i32
  }
  func.func @transform_1(%arg0: i32) -> (i32, i32) {
    %c0_i32 = arith.constant 0 : i32
    %c0_i32_0 = arith.constant 0 : i32
    return %arg0, %c0_i32 : i32, i32
  }
}

</mosaic_0001>

<llo_original>
// kernel: tpu_custom_call.1
$region0: #{tpu_custom_call.1}
  #allocation0 [shape = 'u32[]', space=smem, size = 0x4, offset = 0x4, fixed_abs, tag = 'smem constant byte address 0x4 - core index']
  #allocation1 [shape = 'u32[72,128]{1,0:T(1,128)}', space=vmem, size = 0x9000, scoped, tag = 'internal scratch']
  %s0 = inlined_call_operand.hbm [shape: f32[1,2048], index: 0, kind: input, shape index: {}]
  %s1 = inlined_call_operand.hbm [shape: f32[1,2048], index: 1, kind: output, shape index: {}]
  %s2 = sld [smem:[#allocation0]]
  $region18: #{tpu_custom_call.1} parent=0
    _
  %s4 = ssub.s32 1, %s2
  %s5 = scalar_select 0, %s4, %s2
  $region1: #{tpu_custom_call.1} parent=0
    #allocation2 [shape = 'u8[8192]{0}', space=vmem, size = 0x2000, scoped, tag = 'input window, operand 0, single buffered']
    #allocation3 [shape = 's32[1]{0}', space=sflag, size = 0x4, scoped, tag = 'scoped memory for tpu_custom_call.1']
    #allocation4 [shape = 's32[1]{0}', space=sflag, size = 0x4, scoped, tag = 'scoped memory for tpu_custom_call.1']
    #allocation5 [shape = 'u8[8192]{0}', space=vmem, size = 0x2000, scoped, tag = 'output window, operand 0, single buffered']
    %6 = vsyncpa [#allocation3], 0
    %7 = vsyncpa [#allocation4], 0
    // Predicated region
    $region2: #{tpu_custom_call.1} parent=1 // pred_check
      _
    $region3: #{tpu_custom_call.1} parent=1 // pred_check_branch
      %9 = sbr.rel (0) target = $region5
    $region4: #{tpu_custom_call.1} parent=1 // pred_region
      %11 = vsyncadd [#allocation3], 0
      %s13 = sshll.u32 %s0, 4
      %s14 = int_to_ptr.hbm [resolvable:$true] %s13
      %s15 = sshll.u32 [#allocation2], 4
      %s16 = int_to_ptr.vmem [resolvable:$true] %s15
      %18 = dma.hbm_to_vmem [thread:$0]  %s14, 256, %s16, [#allocation3]
    $region5: #{tpu_custom_call.1} parent=1 // pred_fallthru
      _
    // Predicated region
    $region6: #{tpu_custom_call.1} parent=1 // pred_check
      _
    $region7: #{tpu_custom_call.1} parent=1 // pred_check_branch
      %20 = sbr.rel (0) target = $region9
    $region8: #{tpu_custom_call.1} parent=1 // pred_region
      %22 = dma.done [#allocation3], 256
    $region9: #{tpu_custom_call.1} parent=1 // pred_fallthru
      _
    %v23 = vld [vmem:[#allocation2] sm:$0xff]
    %v24 = vld [vmem:[#allocation2 + $0x8] sm:$0xff]
    %v25 = vadd.f32 %v23, 1.0
    %v26 = vadd.f32 %v24, 1.0
    %27 = vst [vmem:[#allocation5] sm:$0xff] %v25
    %28 = vst [vmem:[#allocation5 + $0x8] sm:$0xff] %v26
    // Predicated region
    $region10: #{tpu_custom_call.1} parent=1 // pred_check
      _
    $region11: #{tpu_custom_call.1} parent=1 // pred_check_branch
      %30 = sbr.rel (0) target = $region13
    $region12: #{tpu_custom_call.1} parent=1 // pred_region
      %32 = vsyncadd [#allocation4], 0
      %s34 = sshll.u32 [#allocation5], 4
      %s35 = int_to_ptr.vmem [resolvable:$true] %s34
      %s36 = sshll.u32 %s1, 4
      %s37 = int_to_ptr.hbm [resolvable:$true] %s36
      %39 = dma.vmem_to_hbm [thread:$0]  %s35, 256, %s37, [#allocation4]
    $region13: #{tpu_custom_call.1} parent=1 // pred_fallthru
      _
    // Predicated region
    $region14: #{tpu_custom_call.1} parent=1 // pred_check
      _
    $region15: #{tpu_custom_call.1} parent=1 // pred_check_branch
      %41 = sbr.rel (0) target = $region17
    $region16: #{tpu_custom_call.1} parent=1 // pred_region
      %43 = dma.done [#allocation4], 256
    $region17: #{tpu_custom_call.1} parent=1 // pred_fallthru
      _
    %44 = vsyncpa [#allocation3], 1
    %45 = vsyncpa [#allocation4], 1

</llo_original>
